<compile_context>
chip_gen: v7x
topology: tpu7x:2x2x1
jax: 0.10.0
libtpu: 0.0.40
codegen_flags: <defaults>
</compile_context>

<pallas_src>
import jax
import jax.numpy as jnp
from jax.experimental import pallas as pl
from jax.experimental.pallas import tpu as pltpu


def _round_up(x, m):
    return ((x + m - 1) // m) * m


_LANE_ALIGN = 256     # v6e/v7x MXU is 2x256x256; 256 is also a multiple of v5e's 128
_SUBLANE_ALIGN = 8


# ---------------------------------------------------------------------------
# Kernels
# ---------------------------------------------------------------------------
def _linear_tanh_single_kernel(x_ref, wt_ref, b_ref, o_ref):
    """Whole problem in one VMEM block: one MXU dot + fused bias + tanh."""
    acc = jnp.dot(x_ref[...], wt_ref[...], preferred_element_type=jnp.float32)
    o_ref[...] = jnp.tanh(acc + b_ref[...]).astype(o_ref.dtype)


def _linear_tanh_tiled_kernel(x_ref, wt_ref, b_ref, o_ref, acc_ref):
    """Tiled matmul with f32 accumulator; bias + tanh fused in the epilogue."""
    k = pl.program_id(2)

    @pl.when(k == 0)
    def _():
        acc_ref[...] = jnp.zeros_like(acc_ref)

    # bf16 x bf16 -> f32 on the MXU; weight was pre-transposed in the wrapper
    # so this is a plain (tb,tk)@(tk,tn) contraction (no per-tile transpose).
    acc_ref[...] += jnp.dot(x_ref[...], wt_ref[...],
                            preferred_element_type=jnp.float32)

    @pl.when(k == pl.num_programs(2) - 1)
    def _():
        o_ref[...] = jnp.tanh(acc_ref[...] + b_ref[...]).astype(o_ref.dtype)


# ---------------------------------------------------------------------------
# Wrapper
# ---------------------------------------------------------------------------
def unit_forward(x, weight, bias, *,
                 tb_target=1024, tn_target=1024, tk_target=1024,
                 force_tiled=False):
    """tanh(x @ weight.T + bias), matching torch.nn.Linear + tanh.

    x:      (B, in_N)      float32
    weight: (out_N, in_N)  float32 (PyTorch nn.Linear layout)
    bias:   (out_N,)       float32
    returns (B, out_N)     float32
    """
    B, in_N = x.shape
    out_N, in_N_w = weight.shape
    assert in_N_w == in_N
    out_dtype = x.dtype
    ob = jnp.dtype(out_dtype).itemsize

    # bf16 operands for the MXU; accumulation/bias/tanh stay in f32.
    x_bf = x.astype(jnp.bfloat16)
    # One-time wrapper-side transpose of the static weight.
    wt_bf = weight.T.astype(jnp.bfloat16)            # (in_N, out_N)
    b2 = bias.reshape(1, out_N).astype(jnp.float32)

    # -------- single-block fast path (small problems) --------
    single_fp = (B * in_N + in_N * out_N) * 2 + B * out_N * ob + out_N * 4
    if not force_tiled and single_fp <= (8 << 20):
        return pl.pallas_call(
            _linear_tanh_single_kernel,
            out_shape=jax.ShapeDtypeStruct((B, out_N), out_dtype),
            cost_estimate=pl.CostEstimate(
                flops=2 * B * in_N * out_N,
                transcendentals=B * out_N,
                bytes_accessed=single_fp + B * out_N * ob,
            ),
        )(x_bf, wt_bf, b2)

    # -------- tiled path --------
    tb = min(_round_up(B, _SUBLANE_ALIGN), tb_target)
    tn = min(_round_up(out_N, _LANE_ALIGN), tn_target)
    tk = min(_round_up(in_N, _LANE_ALIGN), tk_target)

    # Ragged B / out_N tiles are safe (OOB output rows/cols are dropped on
    # writeback), but a ragged K tile would pollute the accumulator, so pad the
    # reduction axis with zeros in HBM instead of falling back to full-K tiles.
    K_pad = _round_up(in_N, tk)
    if K_pad != in_N:
        x_bf = jnp.pad(x_bf, ((0, 0), (0, K_pad - in_N)))
        wt_bf = jnp.pad(wt_bf, ((0, K_pad - in_N), (0, 0)))

    gi = pl.cdiv(B, tb)
    gj = pl.cdiv(out_N, tn)
    gk = K_pad // tk

    # Double-buffered inputs/outputs + f32 accumulator; keep the scoped VMEM
    # limit explicit and under ~48 MiB (safe on v7x's 64 MiB physical VMEM).
    vmem_bytes = (2 * (tb * tk * 2 + tk * tn * 2 + tb * tn * ob)
                  + tb * tn * 4 + 2 * tn * 4)
    vmem_limit = min(max(vmem_bytes + (8 << 20), 32 << 20), 48 << 20)

    cost = pl.CostEstimate(
        flops=2 * B * K_pad * out_N,
        transcendentals=B * out_N,
        # Account for re-reads: x streamed once per out_N tile, weight once per
        # batch tile.
        bytes_accessed=(B * K_pad * 2) * gj + (K_pad * out_N * 2) * gi
                       + out_N * 4 * gi + B * out_N * ob,
    )

    return pl.pallas_call(
        _linear_tanh_tiled_kernel,
        out_shape=jax.ShapeDtypeStruct((B, out_N), out_dtype),
        grid_spec=pltpu.PrefetchScalarGridSpec(
            num_scalar_prefetch=0,
            grid=(gi, gj, gk),
            in_specs=[
                pl.BlockSpec((tb, tk), lambda i, j, k: (i, k)),   # x (bf16)
                pl.BlockSpec((tk, tn), lambda i, j, k: (k, j)),   # weight.T (bf16)
                pl.BlockSpec((1, tn), lambda i, j, k: (0, j)),    # bias (f32)
            ],
            out_specs=pl.BlockSpec((tb, tn), lambda i, j, k: (i, j)),
            scratch_shapes=[pltpu.VMEM((tb, tn), jnp.float32)],
        ),
        compiler_params=pltpu.CompilerParams(
            dimension_semantics=("parallel", "parallel", "arbitrary"),
            vmem_limit_bytes=vmem_limit,
        ),
        cost_estimate=cost,
    )(x_bf, wt_bf, b2)


if __name__ == "__main__":
    key = jax.random.PRNGKey(0)
    kx, kw, kb = jax.random.split(key, 3)

    # Small, lane-dense demo consistent with Unit(in_N=128, out_N=256).
    B, in_N, out_N = 256, 128, 256
    x = jax.random.normal(kx, (B, in_N), dtype=jnp.float32)
    weight = jax.random.normal(kw, (out_N, in_N), dtype=jnp.float32) * 0.1
    bias = jax.random.normal(kb, (out_N,), dtype=jnp.float32) * 0.1

    out = unit_forward(x, weight, bias)          # single-block fast path
    out = jax.block_until_ready(out)
    ref = jnp.tanh(x @ weight.T + bias)
    assert out.shape == (B, out_N)
    # bf16 MXU operands -> relaxed tolerance vs the f32 reference.
    assert jnp.allclose(out, ref, atol=2e-2, rtol=2e-2), \
        float(jnp.max(jnp.abs(out - ref)))

    # Also validate the tiled path (ragged B/out_N tiles, zero-padded K,
    # accumulation + fused epilogue) at small shapes by forcing small tiles.
    B2, in2, out2 = 200, 320, 300
    x2 = jax.random.normal(kx, (B2, in2), dtype=jnp.float32)
    w2 = jax.random.normal(kw, (out2, in2), dtype=jnp.float32) * 0.05
    b2 = jax.random.normal(kb, (out2,), dtype=jnp.float32) * 0.1
    out2_arr = unit_forward(x2, w2, b2, tb_target=128, tn_target=256,
                            tk_target=256, force_tiled=True)
    out2_arr = jax.block_until_ready(out2_arr)
    ref2 = jnp.tanh(x2 @ w2.T + b2)
    assert out2_arr.shape == (B2, out2)
    assert jnp.allclose(out2_arr, ref2, atol=2e-2, rtol=2e-2), \
        float(jnp.max(jnp.abs(out2_arr - ref2)))

    print("KERNEL_OK")
</pallas_src>

<mosaic_0001>
module attributes {stable_mosaic.version = 11 : i64} {
  func.func @_linear_tanh_single_kernel(%arg0: memref<256x128xbf16, #tpu.memory_space<vmem>>, %arg1: memref<128x256xbf16, #tpu.memory_space<vmem>>, %arg2: memref<1x256xf32, #tpu.memory_space<vmem>>, %arg3: memref<256x256xf32, #tpu.memory_space<vmem>>) attributes {dimension_semantics = [], scalar_prefetch = 0 : i64, scratch_operands = 0 : i64, tpu.core_type = #tpu.core_type<tc>} {
    %c0 = arith.constant 0 : index
    %c0_0 = arith.constant 0 : index
    %0 = vector.load %arg0[%c0, %c0_0] : memref<256x128xbf16, #tpu.memory_space<vmem>>, vector<256x128xbf16>
    %c0_1 = arith.constant 0 : index
    %c0_2 = arith.constant 0 : index
    %1 = vector.load %arg1[%c0_1, %c0_2] : memref<128x256xbf16, #tpu.memory_space<vmem>>, vector<128x256xbf16>
    %cst = arith.constant dense<0.000000e+00> : vector<256x256xf32>
    %2 = tpu.matmul %0, %1, %cst {dimension_numbers = #tpu.dot_dimension_numbers<[1], [0], [0], [1], [0, 0, 1, 1], [], []>} : vector<256x128xbf16>, vector<128x256xbf16>, vector<256x256xf32> -> vector<256x256xf32>
    %c0_3 = arith.constant 0 : index
    %c0_4 = arith.constant 0 : index
    %3 = vector.load %arg2[%c0_3, %c0_4] : memref<1x256xf32, #tpu.memory_space<vmem>>, vector<1x256xf32>
    %4 = vector.broadcast %3 : vector<1x256xf32> to vector<256x256xf32>
    %5 = arith.addf %2, %4 : vector<256x256xf32>
    %6 = math.tanh %5 : vector<256x256xf32>
    %c0_5 = arith.constant 0 : index
    %c0_6 = arith.constant 0 : index
    %7 = vector.load %arg3[%c0_5, %c0_6] : memref<256x256xf32, #tpu.memory_space<vmem>>, vector<256x256xf32>
    tpu.vector_store %arg3[%c0_5, %c0_6], %6 {strides = array<i32>} : memref<256x256xf32, #tpu.memory_space<vmem>>, vector<256x256xf32>,
    return
  }
}

</mosaic_0001>

<llo_original>
// kernel: tpu_custom_call.1
$region0: #{tpu_custom_call.1}
  #allocation0 [shape = 'u32[]', space=smem, size = 0x4, offset = 0x4, fixed_abs, tag = 'smem constant byte address 0x4 - core index']
  #allocation1 [shape = 'u32[144,128]{1,0:T(1,128)}', space=vmem, size = 0x12000, scoped, tag = 'internal scratch']
  %s0 = inlined_call_operand.hbm [shape: bf16[256,128], index: 0, kind: input, shape index: {}]
  %s1 = inlined_call_operand.hbm [shape: bf16[128,256], index: 1, kind: input, shape index: {}]
  %s2 = inlined_call_operand.vmem [shape: f32[1,256], index: 2, kind: input, shape index: {}]
  %s3 = inlined_call_operand.hbm [shape: f32[256,256], index: 3, kind: output, shape index: {}]
  %s4 = sld [smem:[#allocation0]]
  $region30: #{tpu_custom_call.1} parent=0
    _
  %s6 = ssub.s32 1, %s4
  %s7 = scalar_select 0, %s6, %s4
  $region1: #{tpu_custom_call.1} parent=0
    #allocation2 [shape = 'u8[65536]{0}', space=vmem, size = 0x10000, scoped, tag = 'input window, operand 0, single buffered']
    #allocation3 [shape = 's32[1]{0}', space=sflag, size = 0x4, scoped, tag = 'scoped memory for tpu_custom_call.1']
    #allocation4 [shape = 's32[1]{0}', space=sflag, size = 0x4, scoped, tag = 'scoped memory for tpu_custom_call.1']
    #allocation5 [shape = 'u8[65536]{0}', space=vmem, size = 0x10000, scoped, tag = 'input window, operand 1, single buffered']
    #allocation6 [shape = 's32[1]{0}', space=sflag, size = 0x4, scoped, tag = 'scoped memory for tpu_custom_call.1']
    #allocation7 [shape = 'u8[262144]{0}', space=vmem, size = 0x40000, scoped, tag = 'output window, operand 0, single buffered']
    %8 = vsyncpa [#allocation3], 0
    %9 = vsyncpa [#allocation6], 0
    %10 = vsyncpa [#allocation4], 0
    // Predicated region
    $region2: #{tpu_custom_call.1} parent=1 // pred_check
      _
    $region3: #{tpu_custom_call.1} parent=1 // pred_check_branch
      %12 = sbr.rel (0) target = $region5
    $region4: #{tpu_custom_call.1} parent=1 // pred_region
      %s14 = ssub.s32 2048, 2048
      %15 = vsyncadd [#allocation3], %s14
      %s16 = sshll.u32 [#allocation2], 4
      %s17 = int_to_ptr.vmem [resolvable:$true] %s16
      %22 = dma.hbm_to_vmem [thread:$0]  %s0, 2048, %s17, [#allocation3], 64, 64, 4
    $region5: #{tpu_custom_call.1} parent=1 // pred_fallthru
      _
    // Predicated region
    $region6: #{tpu_custom_call.1} parent=1 // pred_check
      _
    $region7: #{tpu_custom_call.1} parent=1 // pred_check_branch
      %24 = sbr.rel (0) target = $region9
    $region8: #{tpu_custom_call.1} parent=1 // pred_region
      %s26 = ssub.s32 2048, 2048
      %27 = vsyncadd [#allocation6], %s26
      %s28 = sshll.u32 [#allocation5], 4
      %s29 = int_to_ptr.vmem [resolvable:$true] %s28
      %34 = dma.hbm_to_vmem [thread:$0]  %s1, 2048, %s29, [#allocation6], 128, 128, 8
    $region9: #{tpu_custom_call.1} parent=1 // pred_fallthru
      _
    // Predicated region
    $region10: #{tpu_custom_call.1} parent=1 // pred_check
      _
    $region11: #{tpu_custom_call.1} parent=1 // pred_check_branch
      %36 = sbr.rel (0) target = $region13
    $region12: #{tpu_custom_call.1} parent=1 // pred_region
      _
    $region13: #{tpu_custom_call.1} parent=1 // pred_fallthru
      _
    // Predicated region
    $region14: #{tpu_custom_call.1} parent=1 // pred_check
      _
    $region15: #{tpu_custom_call.1} parent=1 // pred_check_branch
      %38 = sbr.rel (0) target = $region17
    $region16: #{tpu_custom_call.1} parent=1 // pred_region
      %39 = dma.done [#allocation3], 2048
    $region17: #{tpu_custom_call.1} parent=1 // pred_fallthru
      _
    // Predicated region
    $region18: #{tpu_custom_call.1} parent=1 // pred_check
      _
    $region19: #{tpu_custom_call.1} parent=1 // pred_check_branch
      %41 = sbr.rel (0) target = $region21
    $region20: #{tpu_custom_call.1} parent=1 // pred_region
      %42 = dma.done [#allocation6], 2048
    $region21: #{tpu_custom_call.1} parent=1 // pred_fallthru
      _
    %v44 = vld [vmem:[#allocation2] sm:$0xf]
    %v45 = vld [vmem:[#allocation2 + $0x4] sm:$0xf]
    %v46 = vld [vmem:[#allocation2 + $0x8] sm:$0xf]
    %v47 = vld [vmem:[#allocation2 + $0xc] sm:$0xf]
    %v48 = vld [vmem:[#allocation2 + $0x10] sm:$0xf]
    %v49 = vld [vmem:[#allocation2 + $0x14] sm:$0xf]
    %v50 = vld [vmem:[#allocation2 + $0x18] sm:$0xf]
    %v51 = vld [vmem:[#allocation2 + $0x1c] sm:$0xf]
    %v52 = vld [vmem:[#allocation2 + $0x20] sm:$0xf]
    %v53 = vld [vmem:[#allocation2 + $0x24] sm:$0xf]
    %v54 = vld [vmem:[#allocation2 + $0x28] sm:$0xf]
    %v55 = vld [vmem:[#allocation2 + $0x2c] sm:$0xf]
    %v56 = vld [vmem:[#allocation2 + $0x30] sm:$0xf]
    %v57 = vld [vmem:[#allocation2 + $0x34] sm:$0xf]
    %v58 = vld [vmem:[#allocation2 + $0x38] sm:$0xf]
    %v59 = vld [vmem:[#allocation2 + $0x3c] sm:$0xf]
    %v60 = vld [vmem:[#allocation2 + $0x40] sm:$0xf]
    %v61 = vld [vmem:[#allocation2 + $0x44] sm:$0xf]
    %v62 = vld [vmem:[#allocation2 + $0x48] sm:$0xf]
    %v63 = vld [vmem:[#allocation2 + $0x4c] sm:$0xf]
    %v64 = vld [vmem:[#allocation2 + $0x50] sm:$0xf]
    %v65 = vld [vmem:[#allocation2 + $0x54] sm:$0xf]
    %v66 = vld [vmem:[#allocation2 + $0x58] sm:$0xf]
    %v67 = vld [vmem:[#allocation2 + $0x5c] sm:$0xf]
    %v68 = vld [vmem:[#allocation2 + $0x60] sm:$0xf]
    %v69 = vld [vmem:[#allocation2 + $0x64] sm:$0xf]
    %v70 = vld [vmem:[#allocation2 + $0x68] sm:$0xf]
    %v71 = vld [vmem:[#allocation2 + $0x6c] sm:$0xf]
    %v72 = vld [vmem:[#allocation2 + $0x70] sm:$0xf]
    %v73 = vld [vmem:[#allocation2 + $0x74] sm:$0xf]
    %v74 = vld [vmem:[#allocation2 + $0x78] sm:$0xf]
    %v75 = vld [vmem:[#allocation2 + $0x7c] sm:$0xf]
    %v76 = vld [vmem:[#allocation5] sm:$0xff]
    %v77 = vld [vmem:[#allocation5 + $0x8] sm:$0xff]
    %v78 = vld [vmem:[#allocation5 + $0x10] sm:$0xff]
    %v79 = vld [vmem:[#allocation5 + $0x18] sm:$0xff]
    %v80 = vld [vmem:[#allocation5 + $0x20] sm:$0xff]
    %v81 = vld [vmem:[#allocation5 + $0x28] sm:$0xff]
    %v82 = vld [vmem:[#allocation5 + $0x30] sm:$0xff]
    %v83 = vld [vmem:[#allocation5 + $0x38] sm:$0xff]
    %v84 = vld [vmem:[#allocation5 + $0x40] sm:$0xff]
    %v85 = vld [vmem:[#allocation5 + $0x48] sm:$0xff]
    %v86 = vld [vmem:[#allocation5 + $0x50] sm:$0xff]
    %v87 = vld [vmem:[#allocation5 + $0x58] sm:$0xff]
    %v88 = vld [vmem:[#allocation5 + $0x60] sm:$0xff]
    %v89 = vld [vmem:[#allocation5 + $0x68] sm:$0xff]
    %v90 = vld [vmem:[#allocation5 + $0x70] sm:$0xff]
    %v91 = vld [vmem:[#allocation5 + $0x78] sm:$0xff]
    %v92 = vld [vmem:[%s2] sm:$0x3]
    %v94 = vlaneseq
    %v95 = vshrl.u32 %v94, 7
    %v96 = vsub.s32 0, %v95
    %v97 = vrot.slane %v92, %v96
    %v98 = vlaneseq
    %v99 = vshrl.u32 %v98, 7
    %v100 = vsub.s32 1, %v99
    %v101 = vrot.slane %v92, %v100
    %v136 = vunpack.c.l.b16 %v44
    %v137 = vunpack.c.l.b16 %v45
    %v138 = vunpack.c.l.b16 %v46
    %v139 = vunpack.c.l.b16 %v47
    %v140 = vunpack.c.l.b16 %v48
    %v141 = vunpack.c.l.b16 %v49
    %v142 = vunpack.c.l.b16 %v50
    %v143 = vunpack.c.l.b16 %v51
    %v144 = vunpack.c.l.b16 %v52
    %v145 = vunpack.c.l.b16 %v53
    %v146 = vunpack.c.l.b16 %v54
    %v147 = vunpack.c.l.b16 %v55
    %v148 = vunpack.c.l.b16 %v56
    %v149 = vunpack.c.l.b16 %v57
    %v150 = vunpack.c.l.b16 %v58
    %v151 = vunpack.c.l.b16 %v59
    %v152 = vunpack.c.l.b16 %v60
    %v153 = vunpack.c.l.b16 %v61
    %v154 = vunpack.c.l.b16 %v62
    %v155 = vunpack.c.l.b16 %v63
    %v156 = vunpack.c.l.b16 %v64
    %v157 = vunpack.c.l.b16 %v65
    %v158 = vunpack.c.l.b16 %v66
    %v159 = vunpack.c.l.b16 %v67
    %v160 = vunpack.c.l.b16 %v68
    %v161 = vunpack.c.l.b16 %v69
    %v162 = vunpack.c.l.b16 %v70
    %v163 = vunpack.c.l.b16 %v71
    %v164 = vunpack.c.l.b16 %v72
    %v165 = vunpack.c.l.b16 %v73
    %v166 = vunpack.c.l.b16 %v74
    %v167 = vunpack.c.l.b16 %v75
    %v168 = vpack.c.b16 %v137, %v136
    %v169 = vpack.c.b16 %v139, %v138
    %v170 = vpack.c.b16 %v141, %v140
    %v171 = vpack.c.b16 %v143, %v142
    %v172 = vpack.c.b16 %v145, %v144
    %v173 = vpack.c.b16 %v147, %v146
    %v174 = vpack.c.b16 %v149, %v148
    %v175 = vpack.c.b16 %v151, %v150
    %v176 = vpack.c.b16 %v153, %v152
    %v177 = vpack.c.b16 %v155, %v154
    %v178 = vpack.c.b16 %v157, %v156
    %v179 = vpack.c.b16 %v159, %v158
    %v180 = vpack.c.b16 %v161, %v160
    %v181 = vpack.c.b16 %v163, %v162
    %v182 = vpack.c.b16 %v165, %v164
    %v183 = vpack.c.b16 %v167, %v166
    %v216 = vunpack.c.l.b16 %v76
    %v217 = vunpack.c.h.b16 %v76
    %v218 = vunpack.c.l.b16 %v77
    %v219 = vunpack.c.h.b16 %v77
    %v220 = vunpack.c.l.b16 %v78
    %v221 = vunpack.c.h.b16 %v78
    %v222 = vunpack.c.l.b16 %v79
    %v223 = vunpack.c.h.b16 %v79
    %v224 = vunpack.c.l.b16 %v80
    %v225 = vunpack.c.h.b16 %v80
    %v226 = vunpack.c.l.b16 %v81
    %v227 = vunpack.c.h.b16 %v81
    %v228 = vunpack.c.l.b16 %v82
    %v229 = vunpack.c.h.b16 %v82
    %v230 = vunpack.c.l.b16 %v83
    %v231 = vunpack.c.h.b16 %v83
    %v232 = vunpack.c.l.b16 %v84
    %v233 = vunpack.c.h.b16 %v84
    %v234 = vunpack.c.l.b16 %v85
    %v235 = vunpack.c.h.b16 %v85
    %v236 = vunpack.c.l.b16 %v86
    %v237 = vunpack.c.h.b16 %v86
    %v238 = vunpack.c.l.b16 %v87
    %v239 = vunpack.c.h.b16 %v87
    %v240 = vunpack.c.l.b16 %v88
    %v241 = vunpack.c.h.b16 %v88
    %v242 = vunpack.c.l.b16 %v89
    %v243 = vunpack.c.h.b16 %v89
    %v244 = vunpack.c.l.b16 %v90
    %v245 = vunpack.c.h.b16 %v90
    %v246 = vunpack.c.l.b16 %v91
    %v247 = vunpack.c.h.b16 %v91
    %v248 = vpack.c.b16 %v218, %v216
    %v249 = vpack.c.b16 %v219, %v217
    %v250 = vpack.c.b16 %v222, %v220
    %v251 = vpack.c.b16 %v223, %v221
    %v252 = vpack.c.b16 %v226, %v224
    %v253 = vpack.c.b16 %v227, %v225
    %v254 = vpack.c.b16 %v230, %v228
    %v255 = vpack.c.b16 %v231, %v229
    %v256 = vpack.c.b16 %v234, %v232
    %v257 = vpack.c.b16 %v235, %v233
    %v258 = vpack.c.b16 %v238, %v236
    %v259 = vpack.c.b16 %v239, %v237
    %v260 = vpack.c.b16 %v242, %v240
    %v261 = vpack.c.b16 %v243, %v241
    %v262 = vpack.c.b16 %v246, %v244
    %v263 = vpack.c.b16 %v247, %v245
    %280 = vmatprep.subr.bf16.mxu0 %v249
    %281 = vmatpush1.bf16.msra.mxu0 %v248
    %282 = vmatprep.subr.bf16.mxu0 %v251
    %283 = vmatpush1.bf16.msra.mxu0 %v250
    %284 = vmatprep.subr.bf16.mxu0 %v253
    %285 = vmatpush1.bf16.msra.mxu0 %v252
    %286 = vmatprep.subr.bf16.mxu0 %v255
    %287 = vmatpush1.bf16.msra.mxu0 %v254
    %288 = vmatprep.subr.bf16.mxu0 %v257
    %289 = vmatpush1.bf16.msra.mxu0 %v256
    %290 = vmatprep.subr.bf16.mxu0 %v259
    %291 = vmatpush1.bf16.msra.mxu0 %v258
    %292 = vmatprep.subr.bf16.mxu0 %v261
    %293 = vmatpush1.bf16.msra.mxu0 %v260
    %294 = vmatprep.subr.bf16.mxu0 %v263
    %295 = vmatpush1.bf16.msra.mxu0 %v262
    %296 = vmatprep.subr.bf16.mxu0 0
    %297 = vmatpush1.bf16.msra.mxu0 0
    %298 = vmatprep.subr.bf16.mxu0 0
    %299 = vmatpush1.bf16.msra.mxu0 0
    %300 = vmatprep.subr.bf16.mxu0 0
    %301 = vmatpush1.bf16.msra.mxu0 0
    %302 = vmatprep.subr.bf16.mxu0 0
    %303 = vmatpush1.bf16.msra.mxu0 0
    %304 = vmatprep.subr.bf16.mxu0 0
    %305 = vmatpush1.bf16.msra.mxu0 0
    %306 = vmatprep.subr.bf16.mxu0 0
    %307 = vmatpush1.bf16.msra.mxu0 0
    %308 = vmatprep.subr.bf16.mxu0 0
    %309 = vmatpush1.bf16.msra.mxu0 0
    %310 = vmatprep.subr.bf16.mxu0 0
    %311 = vmatpush1.bf16.msra.mxu0 0
    %312 = vmatprep.mubr.bf16.mxu0 0
    %313 = vmatmul.mubr.bf16.gmra.mrb[0].mxu0 %v168
    %v314 = vpop.f32.mrb[0].mxu0
    %v315 = vadd.f32 %v97, %v314
    %v316 = vpop.f32.mrb[0].mxu0
    %v317 = vadd.f32 %v101, %v316
    %v318 = vpop.f32.mrb[0].mxu0
    %v319 = vadd.f32 %v97, %v318
    %v320 = vpop.f32.mrb[0].mxu0
    %v321 = vadd.f32 %v101, %v320
    %322 = vmatprep.mubr.bf16.mxu0 0
    %323 = vmatmul.mubr.bf16.gmra.mrb[0].mxu0 %v169
    %v324 = vpop.f32.mrb[0].mxu0
    %v325 = vadd.f32 %v97, %v324
    %v326 = vpop.f32.mrb[0].mxu0
    %v327 = vadd.f32 %v101, %v326
    %v328 = vpop.f32.mrb[0].mxu0
    %v329 = vadd.f32 %v97, %v328
    %v330 = vpop.f32.mrb[0].mxu0
    %v331 = vadd.f32 %v101, %v330
    %332 = vmatprep.mubr.bf16.mxu0 0
    %333 = vmatmul.mubr.bf16.gmra.mrb[0].mxu0 %v170
    %v334 = vpop.f32.mrb[0].mxu0
    %v335 = vadd.f32 %v97, %v334
    %v336 = vpop.f32.mrb[0].mxu0
    %v337 = vadd.f32 %v101, %v336
    %v338 = vpop.f32.mrb[0].mxu0
    %v339 = vadd.f32 %v97, %v338
    %v340 = vpop.f32.mrb[0].mxu0
    %v341 = vadd.f32 %v101, %v340
    %342 = vmatprep.mubr.bf16.mxu0 0
    %343 = vmatmul.mubr.bf16.gmra.mrb[0].mxu0 %v171
    %v344 = vpop.f32.mrb[0].mxu0
    %v345 = vadd.f32 %v97, %v344
    %v346 = vpop.f32.mrb[0].mxu0
    %v347 = vadd.f32 %v101, %v346
    %v348 = vpop.f32.mrb[0].mxu0
    %v349 = vadd.f32 %v97, %v348
    %v350 = vpop.f32.mrb[0].mxu0
    %v351 = vadd.f32 %v101, %v350
    %352 = vmatprep.mubr.bf16.mxu0 0
    %353 = vmatmul.mubr.bf16.gmra.mrb[0].mxu0 %v172
    %v354 = vpop.f32.mrb[0].mxu0
    %v355 = vadd.f32 %v97, %v354
    %v356 = vpop.f32.mrb[0].mxu0
    %v357 = vadd.f32 %v101, %v356
    %v358 = vpop.f32.mrb[0].mxu0
    %v359 = vadd.f32 %v97, %v358
    %v360 = vpop.f32.mrb[0].mxu0
    %v361 = vadd.f32 %v101, %v360
    %362 = vmatprep.mubr.bf16.mxu0 0
    %363 = vmatmul.mubr.bf16.gmra.mrb[0].mxu0 %v173
    %v364 = vpop.f32.mrb[0].mxu0
    %v365 = vadd.f32 %v97, %v364
    %v366 = vpop.f32.mrb[0].mxu0
    %v367 = vadd.f32 %v101, %v366
    %v368 = vpop.f32.mrb[0].mxu0
    %v369 = vadd.f32 %v97, %v368
    %v370 = vpop.f32.mrb[0].mxu0
    %v371 = vadd.f32 %v101, %v370
    %372 = vmatprep.mubr.bf16.mxu0 0
    %373 = vmatmul.mubr.bf16.gmra.mrb[0].mxu0 %v174
    %v374 = vpop.f32.mrb[0].mxu0
    %v375 = vadd.f32 %v97, %v374
    %v376 = vpop.f32.mrb[0].mxu0
    %v377 = vadd.f32 %v101, %v376
    %v378 = vpop.f32.mrb[0].mxu0
    %v379 = vadd.f32 %v97, %v378
    %v380 = vpop.f32.mrb[0].mxu0
    %v381 = vadd.f32 %v101, %v380
    %382 = vmatprep.mubr.bf16.mxu0 0
    %383 = vmatmul.mubr.bf16.gmra.mrb[0].mxu0 %v175
    %v384 = vpop.f32.mrb[0].mxu0
    %v385 = vadd.f32 %v97, %v384
    %v386 = vpop.f32.mrb[0].mxu0
    %v387 = vadd.f32 %v101, %v386
    %v388 = vpop.f32.mrb[0].mxu0
    %v389 = vadd.f32 %v97, %v388
    %v390 = vpop.f32.mrb[0].mxu0
    %v391 = vadd.f32 %v101, %v390
    %392 = vmatprep.mubr.bf16.mxu0 0
    %393 = vmatmul.mubr.bf16.gmra.mrb[0].mxu0 %v176
    %v394 = vpop.f32.mrb[0].mxu0
    %v395 = vadd.f32 %v97, %v394
    %v396 = vpop.f32.mrb[0].mxu0
    %v397 = vadd.f32 %v101, %v396
    %v398 = vpop.f32.mrb[0].mxu0
    %v399 = vadd.f32 %v97, %v398
    %v400 = vpop.f32.mrb[0].mxu0
    %v401 = vadd.f32 %v101, %v400
    %402 = vmatprep.mubr.bf16.mxu0 0
    %403 = vmatmul.mubr.bf16.gmra.mrb[0].mxu0 %v177
    %v404 = vpop.f32.mrb[0].mxu0
    %v405 = vadd.f32 %v97, %v404
    %v406 = vpop.f32.mrb[0].mxu0
    %v407 = vadd.f32 %v101, %v406
    %v408 = vpop.f32.mrb[0].mxu0
    %v409 = vadd.f32 %v97, %v408
    %v410 = vpop.f32.mrb[0].mxu0
    %v411 = vadd.f32 %v101, %v410
    %412 = vmatprep.mubr.bf16.mxu0 0
    %413 = vmatmul.mubr.bf16.gmra.mrb[0].mxu0 %v178
    %v414 = vpop.f32.mrb[0].mxu0
    %v415 = vadd.f32 %v97, %v414
    %v416 = vpop.f32.mrb[0].mxu0
    %v417 = vadd.f32 %v101, %v416
    %v418 = vpop.f32.mrb[0].mxu0
    %v419 = vadd.f32 %v97, %v418
    %v420 = vpop.f32.mrb[0].mxu0
    %v421 = vadd.f32 %v101, %v420
    %422 = vmatprep.mubr.bf16.mxu0 0
    %423 = vmatmul.mubr.bf16.gmra.mrb[0].mxu0 %v179
    %v424 = vpop.f32.mrb[0].mxu0
    %v425 = vadd.f32 %v97, %v424
    %v426 = vpop.f32.mrb[0].mxu0
    %v427 = vadd.f32 %v101, %v426
    %v428 = vpop.f32.mrb[0].mxu0
    %v429 = vadd.f32 %v97, %v428
    %v430 = vpop.f32.mrb[0].mxu0
    %v431 = vadd.f32 %v101, %v430
    %432 = vmatprep.mubr.bf16.mxu0 0
    %433 = vmatmul.mubr.bf16.gmra.mrb[0].mxu0 %v180
    %v434 = vpop.f32.mrb[0].mxu0
    %v435 = vadd.f32 %v97, %v434
    %v436 = vpop.f32.mrb[0].mxu0
    %v437 = vadd.f32 %v101, %v436
    %v438 = vpop.f32.mrb[0].mxu0
    %v439 = vadd.f32 %v97, %v438
    %v440 = vpop.f32.mrb[0].mxu0
    %v441 = vadd.f32 %v101, %v440
    %442 = vmatprep.mubr.bf16.mxu0 0
    %443 = vmatmul.mubr.bf16.gmra.mrb[0].mxu0 %v181
    %v444 = vpop.f32.mrb[0].mxu0
    %v445 = vadd.f32 %v97, %v444
    %v446 = vpop.f32.mrb[0].mxu0
    %v447 = vadd.f32 %v101, %v446
    %v448 = vpop.f32.mrb[0].mxu0
    %v449 = vadd.f32 %v97, %v448
    %v450 = vpop.f32.mrb[0].mxu0
    %v451 = vadd.f32 %v101, %v450
    %452 = vmatprep.mubr.bf16.mxu0 0
    %453 = vmatmul.mubr.bf16.gmra.mrb[0].mxu0 %v182
    %v454 = vpop.f32.mrb[0].mxu0
    %v455 = vadd.f32 %v97, %v454
    %v456 = vpop.f32.mrb[0].mxu0
    %v457 = vadd.f32 %v101, %v456
    %v458 = vpop.f32.mrb[0].mxu0
    %v459 = vadd.f32 %v97, %v458
    %v460 = vpop.f32.mrb[0].mxu0
    %v461 = vadd.f32 %v101, %v460
    %462 = vmatprep.mubr.bf16.mxu0 0
    %463 = vmatmul.mubr.bf16.gmra.mrb[0].mxu0 %v183
    %v464 = vpop.f32.mrb[0].mxu0
    %v465 = vadd.f32 %v97, %v464
    %v466 = vpop.f32.mrb[0].mxu0
    %v467 = vadd.f32 %v101, %v466
    %v468 = vpop.f32.mrb[0].mxu0
    %v469 = vadd.f32 %v97, %v468
    %v470 = vpop.f32.mrb[0].mxu0
    %v471 = vadd.f32 %v101, %v470
    %472 = vdwg.mxu0
    %v473 = vtanh.pop %v315
    %v474 = vtanh.pop %v317
    %v475 = vtanh.pop %v319
    %v476 = vtanh.pop %v321
    %v477 = vtanh.pop %v325
    %v478 = vtanh.pop %v327
    %v479 = vtanh.pop %v329
    %v480 = vtanh.pop %v331
    %v481 = vtanh.pop %v335
    %v482 = vtanh.pop %v337
    %v483 = vtanh.pop %v339
    %v484 = vtanh.pop %v341
    %v485 = vtanh.pop %v345
    %v486 = vtanh.pop %v347
    %v487 = vtanh.pop %v349
    %v488 = vtanh.pop %v351
    %v489 = vtanh.pop %v355
    %v490 = vtanh.pop %v357
    %v491 = vtanh.pop %v359
    %v492 = vtanh.pop %v361
    %v493 = vtanh.pop %v365
    %v494 = vtanh.pop %v367
    %v495 = vtanh.pop %v369
    %v496 = vtanh.pop %v371
    %v497 = vtanh.pop %v375
    %v498 = vtanh.pop %v377
    %v499 = vtanh.pop %v379
    %v500 = vtanh.pop %v381
    %v501 = vtanh.pop %v385
    %v502 = vtanh.pop %v387
    %v503 = vtanh.pop %v389
    %v504 = vtanh.pop %v391
    %v505 = vtanh.pop %v395
    %v506 = vtanh.pop %v397
    %v507 = vtanh.pop %v399
    %v508 = vtanh.pop %v401
    %v509 = vtanh.pop %v405
    %v510 = vtanh.pop %v407
    %v511 = vtanh.pop %v409
    %v512 = vtanh.pop %v411
    %v513 = vtanh.pop %v415
    %v514 = vtanh.pop %v417
    %v515 = vtanh.pop %v419
    %v516 = vtanh.pop %v421
    %v517 = vtanh.pop %v425
    %v518 = vtanh.pop %v427
    %v519 = vtanh.pop %v429
    %v520 = vtanh.pop %v431
    %v521 = vtanh.pop %v435
    %v522 = vtanh.pop %v437
    %v523 = vtanh.pop %v439
    %v524 = vtanh.pop %v441
    %v525 = vtanh.pop %v445
    %v526 = vtanh.pop %v447
    %v527 = vtanh.pop %v449
    %v528 = vtanh.pop %v451
    %v529 = vtanh.pop %v455
    %v530 = vtanh.pop %v457
    %v531 = vtanh.pop %v459
    %v532 = vtanh.pop %v461
    %v533 = vtanh.pop %v465
    %v534 = vtanh.pop %v467
    %v535 = vtanh.pop %v469
    %v536 = vtanh.pop %v471
    %537 = vst [vmem:[#allocation7] sm:$0xff] %v473
    %538 = vst [vmem:[#allocation7 + $0x8] sm:$0xff] %v474
    %539 = vst [vmem:[#allocation7 + $0x10] sm:$0xff] %v475
    %540 = vst [vmem:[#allocation7 + $0x18] sm:$0xff] %v476
    %541 = vst [vmem:[#allocation7 + $0x20] sm:$0xff] %v477
    %542 = vst [vmem:[#allocation7 + $0x28] sm:$0xff] %v478
    %543 = vst [vmem:[#allocation7 + $0x30] sm:$0xff] %v479
    %544 = vst [vmem:[#allocation7 + $0x38] sm:$0xff] %v480
    %545 = vst [vmem:[#allocation7 + $0x40] sm:$0xff] %v481
    %546 = vst [vmem:[#allocation7 + $0x48] sm:$0xff] %v482
    %547 = vst [vmem:[#allocation7 + $0x50] sm:$0xff] %v483
    %548 = vst [vmem:[#allocation7 + $0x58] sm:$0xff] %v484
    %549 = vst [vmem:[#allocation7 + $0x60] sm:$0xff] %v485
    %550 = vst [vmem:[#allocation7 + $0x68] sm:$0xff] %v486
    %551 = vst [vmem:[#allocation7 + $0x70] sm:$0xff] %v487
    %552 = vst [vmem:[#allocation7 + $0x78] sm:$0xff] %v488
    %553 = vst [vmem:[#allocation7 + $0x80] sm:$0xff] %v489
    %554 = vst [vmem:[#allocation7 + $0x88] sm:$0xff] %v490
    %555 = vst [vmem:[#allocation7 + $0x90] sm:$0xff] %v491
    %556 = vst [vmem:[#allocation7 + $0x98] sm:$0xff] %v492
    %557 = vst [vmem:[#allocation7 + $0xa0] sm:$0xff] %v493
    %558 = vst [vmem:[#allocation7 + $0xa8] sm:$0xff] %v494
    %559 = vst [vmem:[#allocation7 + $0xb0] sm:$0xff] %v495
    %560 = vst [vmem:[#allocation7 + $0xb8] sm:$0xff] %v496
    %561 = vst [vmem:[#allocation7 + $0xc0] sm:$0xff] %v497
    %562 = vst [vmem:[#allocation7 + $0xc8] sm:$0xff] %v498
    %563 = vst [vmem:[#allocation7 + $0xd0] sm:$0xff] %v499
    %564 = vst [vmem:[#allocation7 + $0xd8] sm:$0xff] %v500
    %565 = vst [vmem:[#allocation7 + $0xe0] sm:$0xff] %v501
    %566 = vst [vmem:[#allocation7 + $0xe8] sm:$0xff] %v502
    %567 = vst [vmem:[#allocation7 + $0xf0] sm:$0xff] %v503
    %568 = vst [vmem:[#allocation7 + $0xf8] sm:$0xff] %v504
    %569 = vst [vmem:[#allocation7 + $0x100] sm:$0xff] %v505
    %570 = vst [vmem:[#allocation7 + $0x108] sm:$0xff] %v506
    %571 = vst [vmem:[#allocation7 + $0x110] sm:$0xff] %v507
    %572 = vst [vmem:[#allocation7 + $0x118] sm:$0xff] %v508
    %573 = vst [vmem:[#allocation7 + $0x120] sm:$0xff] %v509
    %574 = vst [vmem:[#allocation7 + $0x128] sm:$0xff] %v510
    %575 = vst [vmem:[#allocation7 + $0x130] sm:$0xff] %v511
    %576 = vst [vmem:[#allocation7 + $0x138] sm:$0xff] %v512
    %577 = vst [vmem:[#allocation7 + $0x140] sm:$0xff] %v513
    %578 = vst [vmem:[#allocation7 + $0x148] sm:$0xff] %v514
    %579 = vst [vmem:[#allocation7 + $0x150] sm:$0xff] %v515
    %580 = vst [vmem:[#allocation7 + $0x158] sm:$0xff] %v516
    %581 = vst [vmem:[#allocation7 + $0x160] sm:$0xff] %v517
    %582 = vst [vmem:[#allocation7 + $0x168] sm:$0xff] %v518
    %583 = vst [vmem:[#allocation7 + $0x170] sm:$0xff] %v519
    %584 = vst [vmem:[#allocation7 + $0x178] sm:$0xff] %v520
    %585 = vst [vmem:[#allocation7 + $0x180] sm:$0xff] %v521
    %586 = vst [vmem:[#allocation7 + $0x188] sm:$0xff] %v522
    %587 = vst [vmem:[#allocation7 + $0x190] sm:$0xff] %v523
    %588 = vst [vmem:[#allocation7 + $0x198] sm:$0xff] %v524
    %589 = vst [vmem:[#allocation7 + $0x1a0] sm:$0xff] %v525
    %590 = vst [vmem:[#allocation7 + $0x1a8] sm:$0xff] %v526
    %591 = vst [vmem:[#allocation7 + $0x1b0] sm:$0xff] %v527
    %592 = vst [vmem:[#allocation7 + $0x1b8] sm:$0xff] %v528
    %593 = vst [vmem:[#allocation7 + $0x1c0] sm:$0xff] %v529
    %594 = vst [vmem:[#allocation7 + $0x1c8] sm:$0xff] %v530
    %595 = vst [vmem:[#allocation7 + $0x1d0] sm:$0xff] %v531
    %596 = vst [vmem:[#allocation7 + $0x1d8] sm:$0xff] %v532
    %597 = vst [vmem:[#allocation7 + $0x1e0] sm:$0xff] %v533
    %598 = vst [vmem:[#allocation7 + $0x1e8] sm:$0xff] %v534
    %599 = vst [vmem:[#allocation7 + $0x1f0] sm:$0xff] %v535
    %600 = vst [vmem:[#allocation7 + $0x1f8] sm:$0xff] %v536
    // Predicated region
    $region22: #{tpu_custom_call.1} parent=1 // pred_check
      _
    $region23: #{tpu_custom_call.1} parent=1 // pred_check_branch
      %602 = sbr.rel (0) target = $region25
    $region24: #{tpu_custom_call.1} parent=1 // pred_region
      %s604 = ssub.s32 8192, 8192
      %605 = vsyncadd [#allocation4], %s604
      %s606 = sshll.u32 [#allocation7], 4
      %s607 = int_to_ptr.vmem [resolvable:$true] %s606
      %612 = dma.vmem_to_hbm [thread:$0]  %s607, 8192, %s3, [#allocation4], 256, 256, 16
    $region25: #{tpu_custom_call.1} parent=1 // pred_fallthru
      _
    // Predicated region
    $region26: #{tpu_custom_call.1} parent=1 // pred_check
      _
    $region27: #{tpu_custom_call.1} parent=1 // pred_check_branch
      %614 = sbr.rel (0) target = $region29
    $region28: #{tpu_custom_call.1} parent=1 // pred_region
      %615 = dma.done [#allocation4], 8192
    $region29: #{tpu_custom_call.1} parent=1 // pred_fallthru
      _
    %616 = vsyncpa [#allocation3], 1
    %617 = vsyncpa [#allocation6], 1
    %618 = vsyncpa [#allocation4], 1

</llo_original>
